<compile_context>
chip_gen: v5e
topology: v5e:2x2
jax: 0.10.0
libtpu: 0.0.40
codegen_flags: <defaults>
</compile_context>

<pallas_src>
import functools

import jax
import jax.numpy as jnp
from jax.experimental import pallas as pl
from jax.experimental.pallas import tpu as pltpu


def _focal_loss_kernel(alpha_ref, logits_ref, targets_ref, out_ref, acc_ref, *,
                       gamma, label_smoothing, num_classes, n_true, tile_n,
                       use_alpha, apply_n1, n1_class_idx, n1_weight_multiplier):
    """One grid step processes a (C, TILE_N) tile of class-major logits."""
    i = pl.program_id(0)

    @pl.when(i == 0)
    def _init():
        acc_ref[...] = jnp.zeros_like(acc_ref)

    logits = logits_ref[...].astype(jnp.float32)        # (C, T) cast post-load
    targets = targets_ref[...].astype(jnp.int32)        # (1, T)
    c, t = logits.shape

    # Numerically stable log-sum-exp over the class (sublane) axis.
    m = jnp.max(logits, axis=0, keepdims=True)                            # (1, T)
    lse = jnp.log(jnp.sum(jnp.exp(logits - m), axis=0, keepdims=True)) + m

    # Target "gather" via select; log_probs (C, T) is never materialized.
    class_ids = jax.lax.broadcasted_iota(jnp.int32, (c, t), 0)
    tgt_mask = class_ids == targets                                       # (C, T)
    picked_logit = jnp.sum(jnp.where(tgt_mask, logits, 0.0),
                           axis=0, keepdims=True)                         # (1, T)
    log_pt = picked_logit - lse                                           # (1, T)
    pt = jnp.exp(log_pt)
    one_minus_pt = jnp.maximum(1.0 - pt, 0.0)   # NaN guard for fractional gamma

    if float(gamma) == 2.0:
        focal = one_minus_pt * one_minus_pt      # 2 VPU muls, no EUP pow
    elif float(gamma) == 1.0:
        focal = one_minus_pt
    elif float(gamma) == 0.0:
        focal = jnp.ones_like(one_minus_pt)
    else:
        focal = one_minus_pt ** jnp.float32(gamma)

    if label_smoothing > 0.0:
        # -(sum_c smooth * log_probs)
        #   = -((1-ls)*log_pt + (ls/num_classes) * sum_c log_probs)
        # with sum_c log_probs = sum_c logits - C * lse   (no (C, T) temp)
        sum_log_probs = jnp.sum(logits, axis=0, keepdims=True) - float(c) * lse
        loss = -focal * ((1.0 - label_smoothing) * log_pt
                         + (label_smoothing / num_classes) * sum_log_probs)
    else:
        loss = -focal * log_pt                                            # (1, T)

    if use_alpha:
        alpha_col = alpha_ref[...].astype(jnp.float32)                    # (C, 1)
        w = jnp.sum(jnp.where(tgt_mask, alpha_col, 0.0),
                    axis=0, keepdims=True)                                # (1, T)
        if apply_n1:
            w = jnp.where(targets == n1_class_idx,
                          w * jnp.float32(n1_weight_multiplier), w)
        loss = w * loss

    # Ragged-tail mask: last tile may extend past N with unspecified data.
    # Explicit select (NOT multiply-by-zero) so Inf/NaN never reach the acc.
    col = i * tile_n + jax.lax.broadcasted_iota(jnp.int32, (1, t), 1)
    acc_ref[...] += jnp.where(col < n_true, loss, 0.0)

    @pl.when(i == pl.num_programs(0) - 1)
    def _finalize():
        out_ref[0, 0] = jnp.sum(acc_ref[...]) / jnp.float32(n_true)


def _vmem_capacity_bytes():
    """Generation-aware VMEM capacity; conservative fallback = v7x per-TC."""
    try:
        return int(pltpu.get_tpu_info().vmem_capacity_bytes)
    except Exception:
        return 64 * 1024 * 1024


def _choose_tile_n(n, c, itemsize, vmem_capacity, max_tile_n=None):
    """Pick a lane-axis tile (multiple of 128) sized against available VMEM."""
    n_up = -(-n // 128) * 128
    # Rough per-lane bytes: double-buffered logits tile in native dtype,
    # ~5 live (C, T) f32 temps, a handful of (1, T) f32 rows, int8 targets x2.
    per_lane = c * (2 * itemsize + 5 * 4) + 8 * 4 + 2
    budget = int(vmem_capacity * 0.35)
    tile = max(128, (budget // per_lane) // 128 * 128)
    tile = min(tile, 65536, n_up)
    if max_tile_n is not None:
        tile = min(tile, max(128, (int(max_tile_n) // 128) * 128))
    return tile, per_lane


def focal_loss(inputs, targets, *, alpha=None, gamma=2.0, label_smoothing=0.0,
               n1_class_idx=1, n1_weight_multiplier=1.0, reduction="mean",
               class_major_inputs=False, max_tile_n=None):
    """Pallas TPU implementation of FocalLoss.forward (reduction='mean')."""
    assert reduction == "mean", "only 'mean' reduction implemented here"

    if class_major_inputs:
        c, n = inputs.shape
        logits_cm = inputs                                  # already (C, N)
    else:
        n, c = inputs.shape
        # TODO(synk): this transpose is one extra HBM pass; fuse it into the
        # producer (e.g. swap matmul operands) and call with
        # class_major_inputs=True to remove it.
        logits_cm = inputs.T                                # (C, N)

    use_alpha = alpha is not None
    # Match the PyTorch module: smoothing branch only when alpha is provided.
    use_smoothing = (label_smoothing > 0.0) and use_alpha
    num_classes = len(alpha) if use_alpha else c
    if use_alpha:
        assert len(alpha) == c, "len(alpha) must match the number of classes"

    # Small sideband: targets as int8 (C <= 127) to shrink the per-step DMA.
    tgt_dtype = jnp.int8 if c <= 127 else jnp.int32
    targets_sb = jnp.reshape(targets, (1, -1)).astype(tgt_dtype)   # (1, N)

    if use_alpha:
        alpha_col = jnp.asarray(alpha, dtype=jnp.float32).reshape(c, 1)
    else:
        alpha_col = jnp.ones((c, 1), dtype=jnp.float32)            # unused

    itemsize = jnp.dtype(logits_cm.dtype).itemsize
    vmem_cap = _vmem_capacity_bytes()
    tile_n, per_lane = _choose_tile_n(n, c, itemsize, vmem_cap, max_tile_n)
    num_tiles = -(-n // tile_n)
    vmem_limit = int(min(vmem_cap * 3 // 5,
                         max(tile_n * per_lane + (1 << 20), 8 * 1024 * 1024)))

    kernel = functools.partial(
        _focal_loss_kernel,
        gamma=float(gamma),
        label_smoothing=float(label_smoothing) if use_smoothing else 0.0,
        num_classes=int(num_classes),
        n_true=int(n),
        tile_n=int(tile_n),
        use_alpha=bool(use_alpha),
        apply_n1=bool(use_alpha and n1_weight_multiplier > 1.0),
        n1_class_idx=int(n1_class_idx),
        n1_weight_multiplier=float(n1_weight_multiplier),
    )

    out = pl.pallas_call(
        kernel,
        out_shape=jax.ShapeDtypeStruct((1, 1), jnp.float32),
        grid=(num_tiles,),
        in_specs=[
            pl.BlockSpec((c, 1), lambda i: (0, 0)),        # alpha column (tiny)
            pl.BlockSpec((c, tile_n), lambda i: (0, i)),   # logits, native dtype
            pl.BlockSpec((1, tile_n), lambda i: (0, i)),   # targets (int8)
        ],
        out_specs=pl.BlockSpec((1, 1), lambda i: (0, 0),
                               memory_space=pltpu.MemorySpace.SMEM),
        scratch_shapes=[pltpu.VMEM((1, tile_n), jnp.float32)],
        compiler_params=pltpu.CompilerParams(
            dimension_semantics=("arbitrary",),
            vmem_limit_bytes=vmem_limit),
    )(alpha_col, logits_cm, targets_sb)
    return out[0, 0]


def _focal_loss_ref(inputs, targets, *, alpha, gamma, label_smoothing,
                    n1_class_idx, n1_weight_multiplier):
    """Pure-JAX reference mirroring the PyTorch module (reduction='mean')."""
    inputs = inputs.astype(jnp.float32)
    n, c = inputs.shape
    num_classes = len(alpha) if alpha is not None else None
    log_probs = jax.nn.log_softmax(inputs, axis=1)
    if label_smoothing > 0 and num_classes is not None:
        onehot = jax.nn.one_hot(targets, c, dtype=jnp.float32)
        smooth = onehot * (1 - label_smoothing) + label_smoothing / num_classes
        loss = -(smooth * log_probs).sum(axis=1)
        probs = jax.nn.softmax(inputs, axis=1)
        target_probs = jnp.take_along_axis(probs, targets[:, None], axis=1)[:, 0]
        focal_weight = (1 - target_probs) ** gamma
        alpha_arr = jnp.asarray(alpha, dtype=jnp.float32)
        alpha_w = alpha_arr[targets]
        if n1_weight_multiplier > 1.0:
            alpha_w = jnp.where(targets == n1_class_idx,
                                alpha_w * n1_weight_multiplier, alpha_w)
        loss = alpha_w * focal_weight * loss
    else:
        log_pt = jnp.take_along_axis(log_probs, targets[:, None], axis=1)[:, 0]
        pt = jnp.exp(log_pt)
        if alpha is not None:
            alpha_arr = jnp.asarray(alpha, dtype=jnp.float32)
            aw = alpha_arr[targets]
            if n1_weight_multiplier > 1.0:
                aw = jnp.where(targets == n1_class_idx,
                               aw * n1_weight_multiplier, aw)
            focal = aw * (1 - pt) ** gamma
        else:
            focal = (1 - pt) ** gamma
        loss = -focal * log_pt
    return loss.mean()


if __name__ == "__main__":
    key = jax.random.PRNGKey(0)
    k_logits, k_targets, k_logits2, k_targets2 = jax.random.split(key, 4)

    N, C = 64, 4
    logits = jax.random.normal(k_logits, (N, C), dtype=jnp.float32)
    targets = jax.random.randint(k_targets, (N,), 0, C, dtype=jnp.int32)

    alpha = [0.25, 0.75, 0.5, 0.5]
    configs = [
        # label-smoothing branch (alpha + smoothing + n1 multiplier)
        dict(alpha=alpha, gamma=2.0, label_smoothing=0.1,
             n1_class_idx=1, n1_weight_multiplier=2.0),
        # standard focal-loss branch with alpha
        dict(alpha=alpha, gamma=2.0, label_smoothing=0.0,
             n1_class_idx=1, n1_weight_multiplier=2.0),
        # standard focal-loss branch without alpha
        dict(alpha=None, gamma=2.0, label_smoothing=0.0,
             n1_class_idx=1, n1_weight_multiplier=1.0),
    ]

    for cfg in configs:
        got = focal_loss(logits, targets, reduction="mean", **cfg)
        got = jax.block_until_ready(got)
        ref = _focal_loss_ref(logits, targets, **cfg)
        assert jnp.allclose(got, ref, rtol=1e-5, atol=1e-5), (cfg, got, ref)

    # Class-major fast path (no wrapper transpose).
    got_cm = focal_loss(logits.T, targets, reduction="mean",
                        class_major_inputs=True, **configs[1])
    got_cm = jax.block_until_ready(got_cm)
    ref_cm = _focal_loss_ref(logits, targets, **configs[1])
    assert jnp.allclose(got_cm, ref_cm, rtol=1e-5, atol=1e-5), (got_cm, ref_cm)

    # Multi-tile + ragged tail (N not a multiple of the forced 128-lane tile).
    N2 = 300
    logits2 = jax.random.normal(k_logits2, (N2, C), dtype=jnp.float32)
    targets2 = jax.random.randint(k_targets2, (N2,), 0, C, dtype=jnp.int32)
    got2 = focal_loss(logits2, targets2, reduction="mean",
                      max_tile_n=128, **configs[0])
    got2 = jax.block_until_ready(got2)
    ref2 = _focal_loss_ref(logits2, targets2, **configs[0])
    assert jnp.allclose(got2, ref2, rtol=1e-5, atol=1e-5), (got2, ref2)

    print("KERNEL_OK")
</pallas_src>

<mosaic_0001>
module attributes {stable_mosaic.version = 11 : i64} {
  func.func @_focal_loss_kernel(%arg0: i32, %arg1: memref<4x1xf32, #tpu.memory_space<vmem>>, %arg2: memref<4x128xf32, #tpu.memory_space<vmem>>, %arg3: memref<1x128xi8, #tpu.memory_space<vmem>>, %arg4: memref<1x1xf32, #tpu.memory_space<smem>>, %arg5: memref<1x128xf32, #tpu.memory_space<vmem>>) attributes {dimension_semantics = [#tpu.dimension_semantics<arbitrary>], iteration_bounds = array<i64: 1>, scalar_prefetch = 0 : i64, scratch_operands = 1 : i64, tpu.core_type = #tpu.core_type<tc>, window_params = [{pipeline_mode = #tpu.pipeline_mode<synchronous>, transform_indices = @transform_0, window_bounds = array<i64: 4, 1>}, {transform_indices = @transform_1, window_bounds = array<i64: 4, 128>}, {transform_indices = @transform_2, window_bounds = array<i64: 1, 128>}, {transform_indices = @transform_3, window_bounds = array<i64: 1, 1>}]} {
    %c0_i32 = arith.constant 0 : i32
    %0 = arith.cmpi eq, %arg0, %c0_i32 : i32
    %1 = arith.extui %0 : i1 to i32
    %c0_i32_0 = arith.constant 0 : i32
    %2 = arith.cmpi ne, %1, %c0_i32_0 : i32
    scf.if %2 {
      %cst_26 = arith.constant 0.000000e+00 : f32
      %69 = vector.broadcast %cst_26 : f32 to vector<1x128xf32>
      %c0_27 = arith.constant 0 : index
      %c0_28 = arith.constant 0 : index
      %70 = vector.load %arg5[%c0_27, %c0_28] : memref<1x128xf32, #tpu.memory_space<vmem>>, vector<1x128xf32>
      tpu.vector_store %arg5[%c0_27, %c0_28], %69 {strides = array<i32>} : memref<1x128xf32, #tpu.memory_space<vmem>>, vector<1x128xf32>,
    } else {
    }
    %c0 = arith.constant 0 : index
    %c0_1 = arith.constant 0 : index
    %3 = vector.load %arg2[%c0, %c0_1] : memref<4x128xf32, #tpu.memory_space<vmem>>, vector<4x128xf32>
    %c0_2 = arith.constant 0 : index
    %c0_3 = arith.constant 0 : index
    %4 = vector.load %arg3[%c0_2, %c0_3] : memref<1x128xi8, #tpu.memory_space<vmem>>, vector<1x128xi8>
    %5 = arith.extsi %4 : vector<1x128xi8> to vector<1x128xi32>
    %cst = arith.constant dense<0xFF800000> : vector<128xf32>
    %6 = vector.multi_reduction <maximumf>, %3, %cst [0] : vector<4x128xf32> to vector<128xf32>
    %7 = vector.shape_cast %6 : vector<128xf32> to vector<1x128xf32>
    %8 = vector.broadcast %7 : vector<1x128xf32> to vector<4x128xf32>
    %9 = arith.subf %3, %8 : vector<4x128xf32>
    %10 = math.exp %9 : vector<4x128xf32>
    %cst_4 = arith.constant dense<0.000000e+00> : vector<128xf32>
    %11 = vector.multi_reduction <add>, %10, %cst_4 [0] : vector<4x128xf32> to vector<128xf32>
    %12 = vector.shape_cast %11 : vector<128xf32> to vector<1x128xf32>
    %13 = math.log %12 : vector<1x128xf32>
    %14 = arith.addf %13, %7 : vector<1x128xf32>
    %15 = tpu.iota {dimensions = array<i32: 0>} : vector<4x128xi32>
    %16 = vector.broadcast %5 : vector<1x128xi32> to vector<4x128xi32>
    %17 = arith.cmpi eq, %15, %16 : vector<4x128xi32>
    %cst_5 = arith.constant 0.000000e+00 : f32
    %18 = vector.broadcast %cst_5 : f32 to vector<4x128xf32>
    %19 = arith.select %17, %3, %18 : vector<4x128xi1>, vector<4x128xf32>
    %cst_6 = arith.constant dense<0.000000e+00> : vector<128xf32>
    %20 = vector.multi_reduction <add>, %19, %cst_6 [0] : vector<4x128xf32> to vector<128xf32>
    %21 = vector.shape_cast %20 : vector<128xf32> to vector<1x128xf32>
    %22 = arith.subf %21, %14 : vector<1x128xf32>
    %23 = math.exp %22 : vector<1x128xf32>
    %cst_7 = arith.constant 1.000000e+00 : f32
    %24 = vector.broadcast %cst_7 : f32 to vector<1x128xf32>
    %25 = arith.subf %24, %23 : vector<1x128xf32>
    %cst_8 = arith.constant 0.000000e+00 : f32
    %26 = vector.broadcast %cst_8 : f32 to vector<1x128xf32>
    %27 = arith.maximumf %25, %26 : vector<1x128xf32>
    %28 = arith.mulf %27, %27 : vector<1x128xf32>
    %cst_9 = arith.constant dense<0.000000e+00> : vector<128xf32>
    %29 = vector.multi_reduction <add>, %3, %cst_9 [0] : vector<4x128xf32> to vector<128xf32>
    %30 = vector.shape_cast %29 : vector<128xf32> to vector<1x128xf32>
    %cst_10 = arith.constant 4.000000e+00 : f32
    %31 = vector.broadcast %cst_10 : f32 to vector<1x128xf32>
    %32 = arith.mulf %31, %14 : vector<1x128xf32>
    %33 = arith.subf %30, %32 : vector<1x128xf32>
    %cst_11 = arith.constant 0.000000e+00 : f32
    %34 = vector.broadcast %cst_11 : f32 to vector<1x128xf32>
    %35 = arith.subf %34, %28 : vector<1x128xf32>
    %cst_12 = arith.constant 0.899999976 : f32
    %36 = vector.broadcast %cst_12 : f32 to vector<1x128xf32>
    %37 = arith.mulf %36, %22 : vector<1x128xf32>
    %cst_13 = arith.constant 2.500000e-02 : f32
    %38 = vector.broadcast %cst_13 : f32 to vector<1x128xf32>
    %39 = arith.mulf %38, %33 : vector<1x128xf32>
    %40 = arith.addf %37, %39 : vector<1x128xf32>
    %41 = arith.mulf %35, %40 : vector<1x128xf32>
    %c0_14 = arith.constant 0 : index
    %c0_15 = arith.constant 0 : index
    %42 = vector.load %arg1[%c0_14, %c0_15] : memref<4x1xf32, #tpu.memory_space<vmem>>, vector<4x1xf32>
    %cst_16 = arith.constant 0.000000e+00 : f32
    %43 = vector.shape_cast %42 : vector<4x1xf32> to vector<4x1xf32>
    %44 = vector.broadcast %43 : vector<4x1xf32> to vector<4x128xf32>
    %45 = vector.broadcast %cst_16 : f32 to vector<4x128xf32>
    %46 = arith.select %17, %44, %45 : vector<4x128xi1>, vector<4x128xf32>
    %cst_17 = arith.constant dense<0.000000e+00> : vector<128xf32>
    %47 = vector.multi_reduction <add>, %46, %cst_17 [0] : vector<4x128xf32> to vector<128xf32>
    %48 = vector.shape_cast %47 : vector<128xf32> to vector<1x128xf32>
    %c1_i32 = arith.constant 1 : i32
    %49 = vector.broadcast %c1_i32 : i32 to vector<1x128xi32>
    %50 = arith.cmpi eq, %5, %49 : vector<1x128xi32>
    %cst_18 = arith.constant 2.000000e+00 : f32
    %51 = vector.broadcast %cst_18 : f32 to vector<1x128xf32>
    %52 = arith.mulf %48, %51 : vector<1x128xf32>
    %53 = arith.select %50, %52, %48 : vector<1x128xi1>, vector<1x128xf32>
    %54 = arith.mulf %53, %41 : vector<1x128xf32>
    %c128_i32 = arith.constant 128 : i32
    %55 = arith.muli %arg0, %c128_i32 : i32
    %56 = tpu.iota {dimensions = array<i32: 1>} : vector<1x128xi32>
    %57 = vector.broadcast %55 : i32 to vector<1x128xi32>
    %58 = arith.addi %57, %56 : vector<1x128xi32>
    %c0_19 = arith.constant 0 : index
    %c0_20 = arith.constant 0 : index
    %59 = vector.load %arg5[%c0_19, %c0_20] : memref<1x128xf32, #tpu.memory_space<vmem>>, vector<1x128xf32>
    %c64_i32 = arith.constant 64 : i32
    %60 = vector.broadcast %c64_i32 : i32 to vector<1x128xi32>
    %61 = arith.cmpi slt, %58, %60 : vector<1x128xi32>
    %cst_21 = arith.constant 0.000000e+00 : f32
    %62 = vector.broadcast %cst_21 : f32 to vector<1x128xf32>
    %63 = arith.select %61, %54, %62 : vector<1x128xi1>, vector<1x128xf32>
    %64 = arith.addf %59, %63 : vector<1x128xf32>
    %c0_22 = arith.constant 0 : index
    %c0_23 = arith.constant 0 : index
    %65 = vector.load %arg5[%c0_22, %c0_23] : memref<1x128xf32, #tpu.memory_space<vmem>>, vector<1x128xf32>
    tpu.vector_store %arg5[%c0_22, %c0_23], %64 {strides = array<i32>} : memref<1x128xf32, #tpu.memory_space<vmem>>, vector<1x128xf32>,
    %c0_i32_24 = arith.constant 0 : i32
    %66 = arith.cmpi eq, %arg0, %c0_i32_24 : i32
    %67 = arith.extui %66 : i1 to i32
    %c0_i32_25 = arith.constant 0 : i32
    %68 = arith.cmpi ne, %67, %c0_i32_25 : i32
    scf.if %68 {
      %c0_26 = arith.constant 0 : index
      %c0_27 = arith.constant 0 : index
      %69 = vector.load %arg5[%c0_26, %c0_27] : memref<1x128xf32, #tpu.memory_space<vmem>>, vector<1x128xf32>
      %70 = vector.shape_cast %69 : vector<1x128xf32> to vector<1x1x128xf32>
      %cst_28 = arith.constant dense<0.000000e+00> : vector<1xf32>
      %71 = vector.multi_reduction <add>, %70, %cst_28 [1, 2] : vector<1x1x128xf32> to vector<1xf32>
      %72 = vector.shape_cast %71 : vector<1xf32> to vector<1x1x1xf32>
      %73 = vector.extract %72[0, 0, 0] : f32 from vector<1x1x1xf32>
      %cst_29 = arith.constant 6.400000e+01 : f32
      %74 = arith.divf %73, %cst_29 : f32
      %c0_30 = arith.constant 0 : index
      %c0_31 = arith.constant 0 : index
      %75 = memref.load %arg4[%c0_30, %c0_31] : memref<1x1xf32, #tpu.memory_space<smem>>
      memref.store %74, %arg4[%c0_30, %c0_31] : memref<1x1xf32, #tpu.memory_space<smem>>
    } else {
    }
    return
  }
  func.func @transform_0(%arg0: i32) -> (i32, i32) {
    %c0_i32 = arith.constant 0 : i32
    %c0_i32_0 = arith.constant 0 : i32
    %c0_i32_1 = arith.constant 0 : i32
    return %c0_i32, %c0_i32_0 : i32, i32
  }
  func.func @transform_1(%arg0: i32) -> (i32, i32) {
    %c0_i32 = arith.constant 0 : i32
    %c0_i32_0 = arith.constant 0 : i32
    return %c0_i32, %arg0 : i32, i32
  }
  func.func @transform_2(%arg0: i32) -> (i32, i32) {
    %c0_i32 = arith.constant 0 : i32
    %c0_i32_0 = arith.constant 0 : i32
    return %c0_i32, %arg0 : i32, i32
  }
  func.func @transform_3(%arg0: i32) -> (i32, i32) {
    %c0_i32 = arith.constant 0 : i32
    %c0_i32_0 = arith.constant 0 : i32
    %c0_i32_1 = arith.constant 0 : i32
    return %c0_i32, %c0_i32_0 : i32, i32
  }
}

</mosaic_0001>

<llo_original>
// kernel: tpu_custom_call.1
$region0: #{tpu_custom_call.1}
  #allocation0 [shape = 'u32[]', space=smem, size = 0x4, offset = 0x4, fixed_abs, tag = 'smem constant byte address 0x4 - core index']
  #allocation1 [shape = 'u32[72,128]{1,0:T(1,128)}', space=vmem, size = 0x9000, scoped, tag = 'internal scratch']
  #allocation2 [shape = 'f32[1,128]{1,0:T(1,128)}', space=vmem, size = 0x200, scoped, tag = 'scratch operand']
  %s0 = inlined_call_operand.vmem [shape: f32[4,1], index: 0, kind: input, shape index: {}]
  %s1 = inlined_call_operand.vmem [shape: f32[4,64], index: 1, kind: input, shape index: {}]
  %s2 = inlined_call_operand.vmem [shape: s8[1,64], index: 2, kind: input, shape index: {}]
  %s3 = inlined_call_operand.hbm [shape: f32[1,1], index: 3, kind: output, shape index: {}]
  %s4 = sld [smem:[#allocation0]]
  $region30: #{tpu_custom_call.1} parent=0
    _
  %s6 = ssub.s32 1, %s4
  %s7 = scalar_select 0, %s6, %s4
  $region1: #{tpu_custom_call.1} parent=0
    #allocation3 [shape = 'u8[512]{0}', space=smem, size = 0x200, scoped, tag = 'output window, operand 0, single buffered']
    #allocation4 [shape = 's32[1]{0}', space=sflag, size = 0x4, scoped, tag = 'scoped memory for tpu_custom_call.1']
    %8 = vsyncpa [#allocation4], 0
    // Predicated region
    $region2: #{tpu_custom_call.1} parent=1 // pred_check
      _
    $region3: #{tpu_custom_call.1} parent=1 // pred_check_branch
      %10 = sbr.rel (0) target = $region5
    $region4: #{tpu_custom_call.1} parent=1 // pred_region
      _
    $region5: #{tpu_custom_call.1} parent=1 // pred_fallthru
      _
    // Predicated region
    $region6: #{tpu_custom_call.1} parent=1 // pred_check
      _
    $region7: #{tpu_custom_call.1} parent=1 // pred_check_branch
      %12 = sbr.rel (0) target = $region9
    $region8: #{tpu_custom_call.1} parent=1 // pred_region
      _
    $region9: #{tpu_custom_call.1} parent=1 // pred_fallthru
      _
    // Predicated region
    $region10: #{tpu_custom_call.1} parent=1 // pred_check
      _
    $region11: #{tpu_custom_call.1} parent=1 // pred_check_branch
      %14 = sbr.rel (0) target = $region13
    $region12: #{tpu_custom_call.1} parent=1 // pred_region
      _
    $region13: #{tpu_custom_call.1} parent=1 // pred_fallthru
      _
    %p15 = scmp.eq.s32.totalorder 0, 0
    // Predicated region
    $region14: #{tpu_custom_call.1} parent=1 // pred_check
      %p16 = pneg %p15
    $region15: #{tpu_custom_call.1} parent=1 // pred_check_branch
      %18 = sbr.rel (%p16) target = $region17
    $region16: #{tpu_custom_call.1} parent=1 // pred_region
      %19 = vst [vmem:[#allocation2] sm:$0x1] 0.0
    $region17: #{tpu_custom_call.1} parent=1 // pred_fallthru
      _
    %v20 = vld [vmem:[%s1] sm:$0xf]
    %v21 = vld [vmem:[%s2] sm:$0x1]
    %v22 = vunpack.c.0.s8 %v21
    %vm23 = vcmask 1043456
    %v24 = vsel %vm23, %v20, -inf
    %v25 = vrot.slane %v24, 4
    %v26 = vmax.f32 %v24, %v25
    %v27 = vrot.slane %v26, 2
    %v28 = vmax.f32 %v26, %v27
    %v29 = vrot.slane %v28, 1
    %v30 = vmax.f32 %v28, %v29
    %v31 = vsub.f32 %v20, %v30
    %v32 = vmul.f32 %v31, 1.442695
    %v33 = vpow.pop %v32
    %v34 = vsel %vm23, %v33, 0.0
    %v35 = vrot.slane %v34, 4
    %v36 = vadd.f32 %v34, %v35
    %v37 = vrot.slane %v36, 2
    %v38 = vadd.f32 %v36, %v37
    %v39 = vrot.slane %v38, 1
    %v40 = vadd.f32 %v38, %v39
    %v41 = vlog2.pop %v40
    %v42 = vmul.f32 %v41, 0.6931472
    %v43 = vadd.f32 %v42, %v30
    %v44 = vlaneseq
    %v45 = vshrl.u32 %v44, 7
    %v46 = vperm.slane %v22, 0
    %vm47 = vcmp.eq.s32.totalorder %v45, %v46
    %v48 = vsel %vm47, %v20, 0.0
    %v49 = vsel %vm23, %v48, 0.0
    %v50 = vrot.slane %v49, 4
    %v51 = vadd.f32 %v49, %v50
    %v52 = vrot.slane %v51, 2
    %v53 = vadd.f32 %v51, %v52
    %v54 = vrot.slane %v53, 1
    %v55 = vadd.f32 %v53, %v54
    %v56 = vsub.f32 %v55, %v43
    %v57 = vmul.f32 %v56, 1.442695
    %v58 = vpow.pop %v57
    %v59 = vsub.f32 1.0, %v58
    %v60 = vmax.f32 %v59, 0.0
    %v61 = vmul.f32 %v60, %v60
    %v62 = vsel %vm23, %v20, 0.0
    %v63 = vrot.slane %v62, 4
    %v64 = vadd.f32 %v62, %v63
    %v65 = vrot.slane %v64, 2
    %v66 = vadd.f32 %v64, %v65
    %v67 = vrot.slane %v66, 1
    %v68 = vadd.f32 %v66, %v67
    %v69 = vmul.f32 %v43, 4.0
    %v70 = vsub.f32 %v68, %v69
    %v71 = vsub.f32 0.0, %v61
    %v72 = vmul.f32 %v56, 0.9
    %v73 = vmul.f32 %v70, 0.025
    %v74 = vadd.f32 %v72, %v73
    %v75 = vmul.f32 %v71, %v74
    %v76 = vld [vmem:[%s0] sm:$0xf]
    %78 = vset.pattern.permute.xlu0 0
    %79 = vperm.xlu0 %78, %v76
    %v80 = vpop.permute.xlu0 %79
    %v82 = vsel %vm47, %v80, 0.0
    %v83 = vsel %vm23, %v82, 0.0
    %v84 = vrot.slane %v83, 4
    %v85 = vadd.f32 %v83, %v84
    %v86 = vrot.slane %v85, 2
    %v87 = vadd.f32 %v85, %v86
    %v88 = vrot.slane %v87, 1
    %v89 = vadd.f32 %v87, %v88
    %vm90 = vcmp.eq.s32.totalorder %v22, 1
    %v91 = vmul.f32 %v89, 2.0
    %v92 = vsel %vm90, %v91, %v89
    %v93 = vmul.f32 %v92, %v75
    %s94 = smul.u32 0, 128
    %v95 = vlaneseq
    %v96 = vand.u32 %v95, 127
    %v97 = vstv %s94
    %v98 = vadd.s32 %v97, %v96
    %v99 = vld [vmem:[#allocation2] sm:$0x1]
    %vm100 = vcmp.lt.s32.totalorder %v98, 64
    %v101 = vsel %vm100, %v93, 0.0
    %v102 = vadd.f32 %v99, %v101
    %103 = vst [vmem:[#allocation2] sm:$0x1] %v102
    // Predicated region
    $region18: #{tpu_custom_call.1} parent=1 // pred_check
      %p104 = pneg %p15
    $region19: #{tpu_custom_call.1} parent=1 // pred_check_branch
      %106 = sbr.rel (%p104) target = $region21
    $region20: #{tpu_custom_call.1} parent=1 // pred_region
      %v107 = vld [vmem:[#allocation2] sm:$0x1]
      %vm108 = vcmask 1040384
      %v109 = vsel %vm108, %v107, 0.0
      %110 = vadd.xlane.f32.xlu0 %v109
      %v111 = vpop.xlane.xlu0 %110
      %v112 = vrot.slane %v111, 4
      %v113 = vadd.f32 %v111, %v112
      %v114 = vrot.slane %v113, 2
      %v115 = vadd.f32 %v113, %v114
      %v116 = vrot.slane %v115, 1
      %v117 = vadd.f32 %v115, %v116
      %s118 = vtos %v117
      %v119 = vrcp.pop 64.0
      %v120 = vmul.f32 64.0, %v119
      %v121 = vsub.f32 1.0, %v120
      %v122 = vmul.f32 %v119, %v121
      %v123 = vadd.f32 %v119, %v122
      %vm124 = vweird.f32 %v119
      %v125 = vsel %vm124, %v119, %v123
      %s126 = vtos %v125
      %s127 = smul.f32 %s118, %s126
      %s128 = scalar_lea.smem [#allocation3], 0
      %129 = sst [smem:[%s128]] %s127
    $region21: #{tpu_custom_call.1} parent=1 // pred_fallthru
      _
    // Predicated region
    $region22: #{tpu_custom_call.1} parent=1 // pred_check
      _
    $region23: #{tpu_custom_call.1} parent=1 // pred_check_branch
      %131 = sbr.rel (0) target = $region25
    $region24: #{tpu_custom_call.1} parent=1 // pred_region
      %133 = vsyncadd [#allocation4], 0
      %s135 = sshll.u32 %s3, 4
      %s136 = int_to_ptr.hbm [resolvable:$true] %s135
      %138 = dma.smem_to_hbm [#allocation3], 16, %s136, [#allocation4]
    $region25: #{tpu_custom_call.1} parent=1 // pred_fallthru
      _
    // Predicated region
    $region26: #{tpu_custom_call.1} parent=1 // pred_check
      _
    $region27: #{tpu_custom_call.1} parent=1 // pred_check_branch
      %140 = sbr.rel (0) target = $region29
    $region28: #{tpu_custom_call.1} parent=1 // pred_region
      %142 = dma.done [#allocation4], 16
    $region29: #{tpu_custom_call.1} parent=1 // pred_fallthru
      _
    %143 = sfence
    %144 = vsyncpa [#allocation4], 1

</llo_original>
